<compile_context>
chip_gen: v5e
topology: v5e:2x2
jax: 0.10.0
libtpu: 0.0.40
codegen_flags: <defaults>
</compile_context>

<pallas_src>
import math

import jax
import jax.numpy as jnp
from jax import lax
from jax.experimental import pallas as pl
from jax.experimental.pallas import tpu as pltpu

BN_EPS = 1e-3  # nn.BatchNorm2d(eps=0.001) inside Conv


def _is_bf16(dt):
    return jnp.dtype(dt) == jnp.dtype(jnp.bfloat16)


def _silu(x, approx):
    den = 1.0 + jnp.exp(-x)
    if approx:
        return x * pl.reciprocal(den, approx=True)  # exp + rcp both on EUP
    return x / den


# ---------------------------------------------------------------------------
# Capability probe: unaligned lane-dim concat (needed by the im2col path)
# ---------------------------------------------------------------------------

_CONCAT_OK = {}


def _lane_concat_supported(dtype):
    key = jnp.dtype(dtype).name
    if key in _CONCAT_OK:
        return _CONCAT_OK[key]

    def k(x_ref, w_ref, o_ref):
        cols = [x_ref[:, :, i, :] for i in range(9)]
        patch = jnp.concatenate(cols, axis=-1).reshape(128, 36)
        o_ref[...] = jnp.dot(patch, w_ref[...],
                             preferred_element_type=jnp.float32)

    ok = False
    try:
        x = jax.random.normal(jax.random.PRNGKey(1), (8, 16, 9, 4)).astype(dtype)
        w = jax.random.normal(jax.random.PRNGKey(2), (36, 8)).astype(dtype)
        out = pl.pallas_call(
            k, out_shape=jax.ShapeDtypeStruct((128, 8), jnp.float32))(x, w)
        ref = jnp.dot(
            jnp.concatenate([x[:, :, i, :] for i in range(9)], -1)
            .reshape(128, 36).astype(jnp.float32),
            w.astype(jnp.float32))
        ok = bool(jnp.allclose(out, ref, atol=2e-2, rtol=2e-2))
    except Exception:
        ok = False
    _CONCAT_OK[key] = ok
    return ok


# ---------------------------------------------------------------------------
# Pointwise (1x1 conv) kernel with fused channel-concat + bias + SiLU
# ---------------------------------------------------------------------------

def _pw_kernel(n_in, act, approx):
    def kernel(*refs):
        xs = refs[:n_in]
        ws = refs[n_in:2 * n_in]
        b_ref = refs[2 * n_in]
        o_ref = refs[2 * n_in + 1]
        # y = act( sum_i x_i @ W_i + b )  -- concat fused as split weights.
        y = jnp.dot(xs[0][...], ws[0][...], preferred_element_type=jnp.float32)
        for i in range(1, n_in):
            y = y + jnp.dot(xs[i][...], ws[i][...],
                            preferred_element_type=jnp.float32)
        y = y + b_ref[...].astype(jnp.float32)
        if act:
            y = _silu(y, approx)
        o_ref[...] = y.astype(o_ref.dtype)

    return kernel


def _pick_row_tile(m, cin_total, cout, itemsize, min_steps=4, max_bytes=4 << 20):
    """Row tile: large (amortise per-step overhead), >=min_steps grid steps,
    double-buffered in+out rows under max_bytes (safe for v5e's 16 MiB scoped
    VMEM, comfortable on v6e/v7x)."""
    if m <= 8:
        return m
    row_bytes = 2 * (cin_total + cout) * itemsize  # double-buffered in + out
    for t in (8192, 4096, 2048, 1024, 512, 256, 128, 64, 32, 16, 8):
        if t * row_bytes <= max_bytes and pl.cdiv(m, t) >= min_steps:
            return t
    return 8


def pointwise_conv_act(xs2d, ws2d, bias_row, act, out_dtype, approx):
    """y = act(sum_i xs2d[i] @ ws2d[i] + bias); each xs2d[i]: (M, Cin_i)."""
    m = xs2d[0].shape[0]
    cout = ws2d[0].shape[1]
    cin_total = sum(x.shape[1] for x in xs2d)
    itemsize = jnp.dtype(xs2d[0].dtype).itemsize
    tm = _pick_row_tile(m, cin_total, cout, itemsize)

    in_specs = ([pl.BlockSpec((tm, x.shape[1]), lambda i: (i, 0)) for x in xs2d]
                + [pl.BlockSpec(w.shape, lambda i: (0, 0)) for w in ws2d]
                + [pl.BlockSpec((1, cout), lambda i: (0, 0))])

    return pl.pallas_call(
        _pw_kernel(len(xs2d), act, approx),
        out_shape=jax.ShapeDtypeStruct((m, cout), out_dtype),
        grid_spec=pltpu.PrefetchScalarGridSpec(
            num_scalar_prefetch=0,
            grid=(pl.cdiv(m, tm),),
            in_specs=in_specs,
            out_specs=pl.BlockSpec((tm, cout), lambda i: (i, 0))),
        compiler_params=pltpu.CompilerParams(
            dimension_semantics=("parallel",)),
    )(*xs2d, *ws2d, bias_row)


# ---------------------------------------------------------------------------
# 3x3 stride-1 pad-1 conv: halo-DMA row tiles + single im2col matmul
# ---------------------------------------------------------------------------

def _pick_h_tile(n, h, wd, cin, cout, itemsize, min_steps=4, max_bytes=6 << 20):
    def foot(th):
        halo = (th + 2) * (wd + 2) * cin * itemsize     # DMA scratch (1 buffer)
        outb = 2 * th * wd * cout * itemsize            # double-buffered output
        resb = 2 * th * wd * cout * itemsize            # double-buffered residual
        return halo + outb + resb

    divs = [d for d in range(1, h + 1) if h % d == 0 and foot(d) <= max_bytes]
    if not divs:
        return 1
    piped = [d for d in divs if n * (h // d) >= min_steps]
    return max(piped) if piped else max(divs)


def _conv3x3_kernel(th, wd, num_h_tiles, cin, cout, act, has_res, approx,
                    im2col):
    m = th * wd

    def kernel(x_hbm, w_ref, b_ref, *rest):
        if has_res:
            r_ref, o_ref, xpad, sem = rest
        else:
            o_ref, xpad, sem = rest

        n_i = pl.program_id(0)
        t_i = pl.program_id(1)
        h0 = t_i * th
        h_img = num_h_tiles * th

        # ---- P4: DMA the unpadded HBM rows (tile + 1-row halos, clamped at
        # the image border) into the zero-padded VMEM scratch. ----
        body = pltpu.make_async_copy(
            x_hbm.at[n_i, pl.ds(h0, th), :, :],
            xpad.at[pl.ds(1, th), pl.ds(1, wd), :], sem.at[0])
        top = pltpu.make_async_copy(
            x_hbm.at[n_i, pl.ds(jnp.maximum(h0 - 1, 0), 1), :, :],
            xpad.at[pl.ds(0, 1), pl.ds(1, wd), :], sem.at[1])
        bot = pltpu.make_async_copy(
            x_hbm.at[n_i, pl.ds(jnp.minimum(h0 + th, h_img - 1), 1), :, :],
            xpad.at[pl.ds(th + 1, 1), pl.ds(1, wd), :], sem.at[2])
        body.start(); top.start(); bot.start()
        body.wait(); top.wait(); bot.wait()

        # Zero the halo columns (never written by the DMAs) and, at image
        # borders, the halo rows.  All stores happen after the DMA waits, so
        # there is no store/DMA race.
        zcol = jnp.zeros((th + 2, 1, cin), xpad.dtype)
        xpad[:, 0:1, :] = zcol
        xpad[:, wd + 1:wd + 2, :] = zcol
        zrow = jnp.zeros((1, wd + 2, cin), xpad.dtype)

        @pl.when(t_i == 0)
        def _():
            xpad[0:1, :, :] = zrow

        @pl.when(t_i == num_h_tiles - 1)
        def _():
            xpad[th + 1:th + 2, :, :] = zrow

        # ---- 3x3 conv on the MXU ----
        wins = [xpad[kh:kh + th, kw:kw + wd, :]
                for kh in range(3) for kw in range(3)]
        if im2col:
            # Single matmul, K = 9*cin (kh-major, kw, cin: matches w_ref).
            patch = jnp.concatenate(wins, axis=-1).reshape(m, 9 * cin)
            y = jnp.dot(patch, w_ref[...], preferred_element_type=jnp.float32)
        else:
            # Fallback: 9 shifted matmuls accumulated in f32.
            y = jnp.zeros((m, cout), jnp.float32)
            for t, win in enumerate(wins):
                y = y + jnp.dot(win.reshape(m, cin), w_ref[t],
                                preferred_element_type=jnp.float32)

        y = y + b_ref[...].astype(jnp.float32)
        if act:
            y = _silu(y, approx)
        y = y.reshape(th, wd, cout)
        if has_res:
            y = y + r_ref[...].astype(jnp.float32)   # fused shortcut add
        o_ref[...] = y.astype(o_ref.dtype)

    return kernel


def conv3x3_act(x_nhwc, w_oihw, bias, act=True, residual=None,
                compute_dtype=jnp.float32):
    """Fused 3x3/s1/p1 conv + folded-BN bias + SiLU (+ residual), NHWC."""
    n, h, wd, cin = x_nhwc.shape
    cout = w_oihw.shape[0]
    approx = _is_bf16(compute_dtype)
    im2col = _lane_concat_supported(compute_dtype)

    w_k = jnp.transpose(w_oihw, (2, 3, 1, 0))            # (3, 3, Cin, Cout)
    if im2col:
        w_k = w_k.reshape(9 * cin, cout).astype(compute_dtype)
        w_spec = pl.BlockSpec((9 * cin, cout), lambda ni, ti: (0, 0))
    else:
        w_k = w_k.reshape(9, cin, cout).astype(compute_dtype)
        w_spec = pl.BlockSpec((9, cin, cout), lambda ni, ti: (0, 0, 0))
    b_row = bias.reshape(1, cout).astype(jnp.float32)

    itemsize = jnp.dtype(compute_dtype).itemsize
    th = _pick_h_tile(n, h, wd, cin, cout, itemsize)
    num_h_tiles = h // th

    x = x_nhwc.astype(compute_dtype)
    has_res = residual is not None
    in_specs = [pl.BlockSpec(memory_space=pl.ANY),        # raw HBM, manual DMA
                w_spec,
                pl.BlockSpec((1, cout), lambda ni, ti: (0, 0))]
    args = [x, w_k, b_row]
    if has_res:
        in_specs.append(pl.BlockSpec((None, th, wd, cout),
                                     lambda ni, ti: (ni, ti, 0, 0)))
        args.append(residual.astype(compute_dtype))

    return pl.pallas_call(
        _conv3x3_kernel(th, wd, num_h_tiles, cin, cout, act, has_res,
                        approx, im2col),
        out_shape=jax.ShapeDtypeStruct((n, h, wd, cout), compute_dtype),
        grid_spec=pltpu.PrefetchScalarGridSpec(
            num_scalar_prefetch=0,
            grid=(n, num_h_tiles),
            in_specs=in_specs,
            out_specs=pl.BlockSpec((None, th, wd, cout),
                                   lambda ni, ti: (ni, ti, 0, 0)),
            scratch_shapes=[
                pltpu.VMEM((th + 2, wd + 2, cin), compute_dtype),
                pltpu.SemaphoreType.DMA((3,)),
            ]),
        compiler_params=pltpu.CompilerParams(
            dimension_semantics=("parallel", "parallel")),
    )(*args)


# ---------------------------------------------------------------------------
# Parameters (inference-mode Conv+BN blocks) and BN folding
# ---------------------------------------------------------------------------

def _make_convbn(key, cin, cout, k):
    kw_, kg, kb, km, kv = jax.random.split(key, 5)
    fan_in = cin * k * k
    return {
        "w": jax.random.normal(kw_, (cout, cin, k, k), jnp.float32)
             / math.sqrt(fan_in),
        "gamma": 1.0 + 0.1 * jax.random.normal(kg, (cout,), jnp.float32),
        "beta": 0.1 * jax.random.normal(kb, (cout,), jnp.float32),
        "rm": 0.1 * jax.random.normal(km, (cout,), jnp.float32),
        "rv": 1.0 + 0.1 * jnp.abs(jax.random.normal(kv, (cout,), jnp.float32)),
        "pad": k // 2,
    }


def _fold_bn(p):
    scale = p["gamma"] / jnp.sqrt(p["rv"] + BN_EPS)
    w_f = p["w"] * scale[:, None, None, None]
    b_f = p["beta"] - p["rm"] * scale
    return w_f, b_f


def _fold_repconvn(p):
    # conv1: 3x3 branch, conv2: 1x1 branch (both BN, no act). Exact fusion:
    # fold each BN, pad the 1x1 into the 3x3 centre tap, sum kernels & biases.
    w3, b3 = _fold_bn(p["conv1"])
    w1, b1 = _fold_bn(p["conv2"])
    w1_3x3 = jnp.pad(w1, ((0, 0), (0, 0), (1, 1), (1, 1)))
    return w3 + w1_3x3, b3 + b1


def init_repncspelan4(key, c1, c2, c3, c4, c5=1):
    keys = iter(jax.random.split(key, 64))

    def conv(cin, cout, k):
        return _make_convbn(next(keys), cin, cout, k)

    def repconvn(cin, cout):
        return {"conv1": conv(cin, cout, 3), "conv2": conv(cin, cout, 1)}

    def bottleneck(c):  # RepNBottleneck(c, c, shortcut=True, e=1.0)
        return {"cv1": repconvn(c, c), "cv2": conv(c, c, 3)}

    def repncsp(cin, cout, n):
        c_ = int(cout * 0.5)
        return {
            "cv1": conv(cin, c_, 1),
            "cv2": conv(cin, c_, 1),
            "cv3": conv(2 * c_, cout, 1),
            "m": [bottleneck(c_) for _ in range(n)],
        }

    return {
        "c": c3 // 2,
        "cv1": conv(c1, c3, 1),
        "cv2_csp": repncsp(c3 // 2, c4, c5),
        "cv2_conv": conv(c4, c4, 3),
        "cv3_csp": repncsp(c4, c4, c5),
        "cv3_conv": conv(c4, c4, 3),
        "cv4": conv(c3 + 2 * c4, c2, 1),
    }


# ---------------------------------------------------------------------------
# Pallas forward (NHWC internally, NCHW at the boundary)
# ---------------------------------------------------------------------------

def _pl_conv1x1(x_list, p, dt, act=True):
    """1x1 Conv+BN+SiLU over the channel-concat of x_list (concat fused)."""
    w_f, b_f = _fold_bn(p)
    n, h, wd, _ = x_list[0].shape
    cout = w_f.shape[0]
    w2d = w_f[:, :, 0, 0].T                               # (Cin_total, Cout)
    xs, ws, off = [], [], 0
    for x in x_list:
        ci = x.shape[-1]
        xs.append(x.reshape(n * h * wd, ci))
        ws.append(w2d[off:off + ci].astype(dt))
        off += ci
    y2d = pointwise_conv_act(xs, ws, b_f.reshape(1, cout).astype(jnp.float32),
                             act, dt, _is_bf16(dt))
    return y2d.reshape(n, h, wd, cout)


def _pl_conv3x3(x, p, dt, act=True, residual=None):
    w_f, b_f = _fold_bn(p)
    return conv3x3_act(x, w_f, b_f, act=act, residual=residual,
                       compute_dtype=dt)


def _pl_repconvn(x, p, dt):
    w_eq, b_eq = _fold_repconvn(p)
    return conv3x3_act(x, w_eq, b_eq, act=True, compute_dtype=dt)


def _pl_bottleneck(x, p, dt):
    y = _pl_repconvn(x, p["cv1"], dt)
    # shortcut add fused into the second 3x3 conv kernel
    return _pl_conv3x3(y, p["cv2"], dt, act=True, residual=x)


def _pl_repncsp(x, p, dt):
    a = _pl_conv1x1([x], p["cv1"], dt)
    for bp in p["m"]:
        a = _pl_bottleneck(a, bp, dt)
    b = _pl_conv1x1([x], p["cv2"], dt)
    return _pl_conv1x1([a, b], p["cv3"], dt)      # cv3 concat fused


def repncspelan4_forward(x_nchw, params, compute_dtype=jnp.float32):
    """Pallas forward. Input/output NCHW to match the PyTorch module."""
    dt = compute_dtype
    x = jnp.transpose(x_nchw, (0, 2, 3, 1)).astype(dt)   # NHWC: C on lanes
    y = _pl_conv1x1([x], params["cv1"], dt)
    c = params["c"]
    y2 = y[..., c:]
    y3 = _pl_conv3x3(_pl_repncsp(y2, params["cv2_csp"], dt),
                     params["cv2_conv"], dt)
    y4 = _pl_conv3x3(_pl_repncsp(y3, params["cv3_csp"], dt),
                     params["cv3_conv"], dt)
    # ELAN concat fused into cv4: concat([y1, y2, y3, y4]) == concat([y, y3, y4]).
    out = _pl_conv1x1([y, y3, y4], params["cv4"], dt)
    return jnp.transpose(out, (0, 3, 1, 2)).astype(x_nchw.dtype)


# ---------------------------------------------------------------------------
# Pure-JAX reference mirroring the (unfused) PyTorch forward graph
# ---------------------------------------------------------------------------

def _ref_conv(x, w, pad):
    return lax.conv_general_dilated(
        x, w, window_strides=(1, 1),
        padding=[(pad, pad), (pad, pad)],
        dimension_numbers=("NCHW", "OIHW", "NCHW"))


def _ref_bn(x, p):
    scale = p["gamma"] / jnp.sqrt(p["rv"] + BN_EPS)
    bias = p["beta"] - p["rm"] * scale
    return x * scale[None, :, None, None] + bias[None, :, None, None]


def _ref_silu(x):
    return x * jax.nn.sigmoid(x)


def _ref_convbn(x, p, act=True):
    y = _ref_bn(_ref_conv(x, p["w"], p["pad"]), p)
    return _ref_silu(y) if act else y


def _ref_repconvn(x, p):
    y = (_ref_bn(_ref_conv(x, p["conv1"]["w"], 1), p["conv1"])
         + _ref_bn(_ref_conv(x, p["conv2"]["w"], 0), p["conv2"]))
    return _ref_silu(y)


def _ref_bottleneck(x, p):
    return x + _ref_convbn(_ref_repconvn(x, p["cv1"]), p["cv2"])


def _ref_repncsp(x, p):
    a = _ref_convbn(x, p["cv1"])
    for bp in p["m"]:
        a = _ref_bottleneck(a, bp)
    b = _ref_convbn(x, p["cv2"])
    return _ref_convbn(jnp.concatenate([a, b], axis=1), p["cv3"])


def repncspelan4_reference(x, p):
    y = _ref_convbn(x, p["cv1"])
    c = p["c"]
    y1, y2 = y[:, :c], y[:, c:]
    y3 = _ref_convbn(_ref_repncsp(y2, p["cv2_csp"]), p["cv2_conv"])
    y4 = _ref_convbn(_ref_repncsp(y3, p["cv3_csp"]), p["cv3_conv"])
    return _ref_convbn(jnp.concatenate([y1, y2, y3, y4], axis=1), p["cv4"])


# ---------------------------------------------------------------------------

if __name__ == "__main__":
    key = jax.random.PRNGKey(0)
    kp, kx = jax.random.split(key)

    # Small shapes consistent with RepNCSPELAN4(c1=8, c2=16, c3=8, c4=8).
    N, C1, H, W = 2, 8, 16, 16
    C2, C3, C4, C5 = 16, 8, 8, 1

    params = init_repncspelan4(kp, C1, C2, C3, C4, C5)
    x = jax.random.normal(kx, (N, C1, H, W), jnp.float32)

    ref = jax.block_until_ready(repncspelan4_reference(x, params))

    # Exact f32 path.
    out = jax.block_until_ready(
        repncspelan4_forward(x, params, compute_dtype=jnp.float32))
    assert out.shape == (N, C2, H, W) and out.dtype == jnp.float32
    err32 = float(jnp.max(jnp.abs(out - ref)))
    assert err32 < 1e-3, err32

    # bf16-MXU path (activations/weights bf16, f32 accumulate/bias/SiLU).
    out16 = jax.block_until_ready(
        repncspelan4_forward(x, params, compute_dtype=jnp.bfloat16))
    err16 = float(jnp.max(jnp.abs(out16 - ref)))
    assert err16 < 3e-1, err16

    print("KERNEL_OK")
</pallas_src>

<mosaic_0001>
module attributes {stable_mosaic.version = 11 : i64} {
  func.func @kernel(%arg0: i32, %arg1: memref<128x8xf32, #tpu.memory_space<vmem>>, %arg2: memref<8x8xf32, #tpu.memory_space<vmem>>, %arg3: memref<1x8xf32, #tpu.memory_space<vmem>>, %arg4: memref<128x8xf32, #tpu.memory_space<vmem>>) attributes {dimension_semantics = [#tpu.dimension_semantics<parallel>], iteration_bounds = array<i64: 4>, scalar_prefetch = 0 : i64, scratch_operands = 0 : i64, tpu.core_type = #tpu.core_type<tc>, window_params = [{transform_indices = @transform_0, window_bounds = array<i64: 128, 8>}, {pipeline_mode = #tpu.pipeline_mode<synchronous>, transform_indices = @transform_1, window_bounds = array<i64: 8, 8>}, {pipeline_mode = #tpu.pipeline_mode<synchronous>, transform_indices = @transform_2, window_bounds = array<i64: 1, 8>}, {transform_indices = @transform_3, window_bounds = array<i64: 128, 8>}]} {
    %c0 = arith.constant 0 : index
    %c0_0 = arith.constant 0 : index
    %0 = vector.load %arg1[%c0, %c0_0] : memref<128x8xf32, #tpu.memory_space<vmem>>, vector<128x8xf32>
    %c0_1 = arith.constant 0 : index
    %c0_2 = arith.constant 0 : index
    %1 = vector.load %arg2[%c0_1, %c0_2] : memref<8x8xf32, #tpu.memory_space<vmem>>, vector<8x8xf32>
    %cst = arith.constant dense<0.000000e+00> : vector<128x8xf32>
    %2 = tpu.matmul %0, %1, %cst {dimension_numbers = #tpu.dot_dimension_numbers<[1], [0], [0], [1], [0, 0, 1, 1], [], []>} : vector<128x8xf32>, vector<8x8xf32>, vector<128x8xf32> -> vector<128x8xf32>
    %c0_3 = arith.constant 0 : index
    %c0_4 = arith.constant 0 : index
    %3 = vector.load %arg3[%c0_3, %c0_4] : memref<1x8xf32, #tpu.memory_space<vmem>>, vector<1x8xf32>
    %4 = vector.broadcast %3 : vector<1x8xf32> to vector<128x8xf32>
    %5 = arith.addf %2, %4 : vector<128x8xf32>
    %cst_5 = arith.constant 0.000000e+00 : f32
    %6 = vector.broadcast %cst_5 : f32 to vector<128x8xf32>
    %7 = arith.subf %6, %5 : vector<128x8xf32>
    %8 = math.exp %7 : vector<128x8xf32>
    %cst_6 = arith.constant 1.000000e+00 : f32
    %9 = vector.broadcast %cst_6 : f32 to vector<128x8xf32>
    %10 = arith.addf %9, %8 : vector<128x8xf32>
    %11 = arith.divf %5, %10 : vector<128x8xf32>
    %c0_7 = arith.constant 0 : index
    %c0_8 = arith.constant 0 : index
    %12 = vector.load %arg4[%c0_7, %c0_8] : memref<128x8xf32, #tpu.memory_space<vmem>>, vector<128x8xf32>
    tpu.vector_store %arg4[%c0_7, %c0_8], %11 {strides = array<i32>} : memref<128x8xf32, #tpu.memory_space<vmem>>, vector<128x8xf32>,
    return
  }
  func.func @transform_0(%arg0: i32) -> (i32, i32) {
    %c0_i32 = arith.constant 0 : i32
    %c0_i32_0 = arith.constant 0 : i32
    return %arg0, %c0_i32 : i32, i32
  }
  func.func @transform_1(%arg0: i32) -> (i32, i32) {
    %c0_i32 = arith.constant 0 : i32
    %c0_i32_0 = arith.constant 0 : i32
    %c0_i32_1 = arith.constant 0 : i32
    return %c0_i32, %c0_i32_0 : i32, i32
  }
  func.func @transform_2(%arg0: i32) -> (i32, i32) {
    %c0_i32 = arith.constant 0 : i32
    %c0_i32_0 = arith.constant 0 : i32
    %c0_i32_1 = arith.constant 0 : i32
    return %c0_i32, %c0_i32_0 : i32, i32
  }
  func.func @transform_3(%arg0: i32) -> (i32, i32) {
    %c0_i32 = arith.constant 0 : i32
    %c0_i32_0 = arith.constant 0 : i32
    return %arg0, %c0_i32 : i32, i32
  }
}

</mosaic_0001>

<llo_original>
// kernel: tpu_custom_call.1
$region0: #{tpu_custom_call.1}
  #allocation0 [shape = 'u32[]', space=smem, size = 0x4, offset = 0x4, fixed_abs, tag = 'smem constant byte address 0x4 - core index']
  #allocation1 [shape = 'u32[72,128]{1,0:T(1,128)}', space=vmem, size = 0x9000, scoped, tag = 'internal scratch']
  %s0 = inlined_call_operand.vmem [shape: f32[512,8], index: 0, kind: input, shape index: {}]
  %s1 = inlined_call_operand.vmem [shape: f32[8,8], index: 1, kind: input, shape index: {}]
  %s2 = inlined_call_operand.vmem [shape: f32[1,8], index: 2, kind: input, shape index: {}]
  %s3 = inlined_call_operand.vmem [shape: f32[512,8], index: 3, kind: output, shape index: {}]
  %s4 = sld [smem:[#allocation0]]
  $region45: #{tpu_custom_call.1} parent=0
    _
  %s6 = ssub.s32 1, %s4
  %s7 = scalar_select 0, %s6, %s4
  loop: start=0, step=1, limit=6
  $region2: #{tpu_custom_call.1} parent=0 // loop_pre_header
    _
  $region3: #{tpu_custom_call.1} parent=0 // loop_header
    %s9 = sphi 0, %s13
    %p10 = scmp.ge.s32.totalorder %s9, 6
    %s19 = sphi 0, %s21
    %s22 = sphi 0, %s19
    %s23 = sphi 0, %s22
    %s39 = sphi 0, %s23
    %s43 = sphi 0, %s43
    %s45 = sphi 0, %s43
    %s46 = sphi 0, %s45
    %s60 = sphi 0, %s46
    %s64 = sphi 0, %s64
    %s66 = sphi 0, %s64
    %s67 = sphi 0, %s66
    %s81 = sphi 0, %s67
    %s87 = sphi 0, %s89
    %s90 = sphi 0, %s87
    %s91 = sphi 0, %s90
    %s107 = sphi 0, %s91
  $region4: #{tpu_custom_call.1} parent=0 // loop_header_branch
    %12 = sbr.rel (%p10) target = $region8
  $region5: #{tpu_custom_call.1} parent=0 // loop_body
    %s14 = ssub.s32 %s9, 1
    %s15 = ssub.s32 %s9, 2
    %s16 = sadd.s32 %s9, 1
    %s17 = ssub.s32 %s9, %s16
    %p18 = scmp.eq.s32.totalorder %s17, 0
    %s20 = sadd.s32 %s19, 1
    %s21 = scalar_select %p18, %s19, %s20
    %p24 = pneg %p18
    %p25 = scmp.eq.s32.totalorder %s9, 3
    %p26 = por %p24, %p25
    %p27 = scmp.ne.s32.totalorder %s19, %s22
    %p28 = scmp.eq.s32.totalorder %s9, 0
    %p29 = por %p27, %p28
    %p30 = scmp.ne.s32.totalorder %s19, %s22
    %p31 = scmp.eq.s32.totalorder %s14, 3
    %p32 = por %p30, %p31
    %p33 = scmp.ne.s32.totalorder %s22, %s23
    %p34 = scmp.eq.s32.totalorder %s14, 0
    %p35 = por %p33, %p34
    %p36 = scmp.ne.s32.totalorder %s22, %s23
    %p37 = scmp.eq.s32.totalorder %s15, 3
    %p38 = por %p36, %p37
    %p40 = scmp.ne.s32.totalorder %s23, %s39
    %p41 = scmp.eq.s32.totalorder %s15, 0
    %p42 = por %p40, %p41
    %s44 = sadd.s32 %s43, 1
    %p47 = scmp.eq.s32.totalorder %s9, 3
    %p48 = scmp.ne.s32.totalorder %s43, %s45
    %p49 = scmp.eq.s32.totalorder %s9, 0
    %p50 = por %p48, %p49
    %p51 = scmp.ne.s32.totalorder %s43, %s45
    %p52 = scmp.eq.s32.totalorder %s14, 3
    %p53 = por %p51, %p52
    %p54 = scmp.ne.s32.totalorder %s45, %s46
    %p55 = scmp.eq.s32.totalorder %s14, 0
    %p56 = por %p54, %p55
    %p57 = scmp.ne.s32.totalorder %s45, %s46
    %p58 = scmp.eq.s32.totalorder %s15, 3
    %p59 = por %p57, %p58
    %p61 = scmp.ne.s32.totalorder %s46, %s60
    %p62 = scmp.eq.s32.totalorder %s15, 0
    %p63 = por %p61, %p62
    %s65 = sadd.s32 %s64, 1
    %p68 = scmp.eq.s32.totalorder %s9, 3
    %p69 = scmp.ne.s32.totalorder %s64, %s66
    %p70 = scmp.eq.s32.totalorder %s9, 0
    %p71 = por %p69, %p70
    %p72 = scmp.ne.s32.totalorder %s64, %s66
    %p73 = scmp.eq.s32.totalorder %s14, 3
    %p74 = por %p72, %p73
    %p75 = scmp.ne.s32.totalorder %s66, %s67
    %p76 = scmp.eq.s32.totalorder %s14, 0
    %p77 = por %p75, %p76
    %p78 = scmp.ne.s32.totalorder %s66, %s67
    %p79 = scmp.eq.s32.totalorder %s15, 3
    %p80 = por %p78, %p79
    %p82 = scmp.ne.s32.totalorder %s67, %s81
    %p83 = scmp.eq.s32.totalorder %s15, 0
    %p84 = por %p82, %p83
    %s85 = ssub.s32 %s9, %s16
    %p86 = scmp.eq.s32.totalorder %s85, 0
    %s88 = sadd.s32 %s87, 1
    %s89 = scalar_select %p86, %s87, %s88
    %p92 = pneg %p86
    %p93 = scmp.eq.s32.totalorder %s9, 3
    %p94 = por %p92, %p93
    %p95 = scmp.ne.s32.totalorder %s87, %s90
    %p96 = scmp.eq.s32.totalorder %s9, 0
    %p97 = por %p95, %p96
    %p98 = scmp.ne.s32.totalorder %s87, %s90
    %p99 = scmp.eq.s32.totalorder %s14, 3
    %p100 = por %p98, %p99
    %p101 = scmp.ne.s32.totalorder %s90, %s91
    %p102 = scmp.eq.s32.totalorder %s14, 0
    %p103 = por %p101, %p102
    %p104 = scmp.ne.s32.totalorder %s90, %s91
    %p105 = scmp.eq.s32.totalorder %s15, 3
    %p106 = por %p104, %p105
    %p108 = scmp.ne.s32.totalorder %s91, %s107
    %p109 = scmp.eq.s32.totalorder %s15, 0
    %p110 = por %p108, %p109
    %p111 = scmp.le.s32.totalorder 1, %s9
    %p112 = scmp.lt.s32.totalorder %s9, 5
    %p113 = pnand %p111, %p112
    %p114 = pneg %p113
    // Predicated region
    $region9: #{tpu_custom_call.1} parent=5 // pred_check
      _
    $region10: #{tpu_custom_call.1} parent=5 // pred_check_branch
      %116 = sbr.rel (%p113) target = $region12
    $region11: #{tpu_custom_call.1} parent=5 // pred_region
      %s117 = ssub.s32 %s9, 1
      // Predicated region
      $region13: #{tpu_custom_call.1} parent=11 // pred_check
        %p118 = pneg %p56
      $region14: #{tpu_custom_call.1} parent=11 // pred_check_branch
        %120 = sbr.rel (%p118) target = $region16
      $region15: #{tpu_custom_call.1} parent=11 // pred_region
        _
      $region16: #{tpu_custom_call.1} parent=11 // pred_fallthru
        _
      // Predicated region
      $region17: #{tpu_custom_call.1} parent=11 // pred_check
        %p121 = pneg %p77
      $region18: #{tpu_custom_call.1} parent=11 // pred_check_branch
        %123 = sbr.rel (%p121) target = $region20
      $region19: #{tpu_custom_call.1} parent=11 // pred_region
        _
      $region20: #{tpu_custom_call.1} parent=11 // pred_fallthru
        _
    $region12: #{tpu_custom_call.1} parent=5 // pred_fallthru
      _
    %p124 = scmp.lt.s32.totalorder %s9, 4
    // Predicated region
    $region21: #{tpu_custom_call.1} parent=5 // pred_check
      %p125 = pneg %p124
    $region22: #{tpu_custom_call.1} parent=5 // pred_check_branch
      %127 = sbr.rel (%p125) target = $region24
    $region23: #{tpu_custom_call.1} parent=5 // pred_region
      // Predicated region
      $region25: #{tpu_custom_call.1} parent=23 // pred_check
        %p128 = pneg %p29
      $region26: #{tpu_custom_call.1} parent=23 // pred_check_branch
        %130 = sbr.rel (%p128) target = $region28
      $region27: #{tpu_custom_call.1} parent=23 // pred_region
        %s131 = smul.u32 16, %s9
        %p132 = scmp.lt.s32.totalorder %s131, 63
        %s133 = scalar_select %p132, %s131, 63
        %s134 = smul.addr %s133, 8
        %s135 = scalar_lea.vmem %s0, %s134
        %s136 = smul.u32 16, %s9
      $region28: #{tpu_custom_call.1} parent=23 // pred_fallthru
        _
    $region24: #{tpu_custom_call.1} parent=5 // pred_fallthru
      _
    %p137 = scmp.le.s32.totalorder 1, %s9
    %p138 = scmp.lt.s32.totalorder %s9, 5
    %p139 = pnand %p137, %p138
    %p140 = pneg %p139
    // Predicated region
    $region29: #{tpu_custom_call.1} parent=5 // pred_check
      _
    $region30: #{tpu_custom_call.1} parent=5 // pred_check_branch
      %142 = sbr.rel (%p139) target = $region32
    $region31: #{tpu_custom_call.1} parent=5 // pred_region
      %s143 = ssub.s32 %s9, 1
      %s144 = smul.u32 16, %s14
      %p145 = scmp.lt.s32.totalorder %s144, 63
      %s146 = scalar_select %p145, %s144, 63
      %s147 = smul.addr %s146, 8
      %s148 = scalar_lea.vmem %s0, %s147
      %p149 = pneg %p35
      %p150 = pneg %p32
      %p151 = pneg %p56
      %p152 = pneg %p53
      %p153 = pneg %p77
      %p154 = pneg %p74
      %p155 = pneg %p103
      %p156 = pneg %p100
      %s157 = smul.u32 16, %s14
      %p158 = scmp.lt.s32.totalorder %s157, 63
      %s159 = scalar_select %p158, %s157, 63
      %s160 = smul.addr %s159, 8
      %s161 = scalar_lea.vmem %s3, %s160
      %s162 = smul.u32 16, %s14
      %p163 = scmp.lt.s32.totalorder %s162, 63
      %s164 = scalar_select %p163, %s162, 63
      %s165 = smul.addr %s164, 8
      %s166 = scalar_lea.vmem %s0, %s165
      %s167 = smul.u32 16, %s14
      %s168 = smul.u32 16, %s14
      %p169 = scmp.lt.s32.totalorder %s168, 63
      %s170 = scalar_select %p169, %s168, 63
      %s171 = smul.addr %s170, 8
      %s172 = scalar_lea.vmem %s3, %s171
      %s173 = smul.u32 16, %s14
      %v174 = vld [vmem:[%s166] sm:$0xff]
      %v175 = vld [vmem:[%s166 + $0x8] sm:$0xff]
      %v176 = vld [vmem:[%s166 + $0x10] sm:$0xff]
      %v177 = vld [vmem:[%s166 + $0x18] sm:$0xff]
      %v178 = vld [vmem:[%s166 + $0x20] sm:$0xff]
      %v179 = vld [vmem:[%s166 + $0x28] sm:$0xff]
      %v180 = vld [vmem:[%s166 + $0x30] sm:$0xff]
      %v181 = vld [vmem:[%s166 + $0x38] sm:$0xff]
      %v182 = vld [vmem:[%s166 + $0x40] sm:$0xff]
      %v183 = vld [vmem:[%s166 + $0x48] sm:$0xff]
      %v184 = vld [vmem:[%s166 + $0x50] sm:$0xff]
      %v185 = vld [vmem:[%s166 + $0x58] sm:$0xff]
      %v186 = vld [vmem:[%s166 + $0x60] sm:$0xff]
      %v187 = vld [vmem:[%s166 + $0x68] sm:$0xff]
      %v188 = vld [vmem:[%s166 + $0x70] sm:$0xff]
      %v189 = vld [vmem:[%s166 + $0x78] sm:$0xff]
      %v190 = vld [vmem:[%s1] sm:$0xff]
      %v191 = vld [vmem:[%s2] sm:$0x1]
      %v193 = vperm.slane %v191, 0
      %vm195 = vcmask 64512
      %v197 = vsel %vm195, %v174, 0
      %v200 = vsel %vm195, %v175, 0
      %v203 = vsel %vm195, %v176, 0
      %v206 = vsel %vm195, %v177, 0
      %v209 = vsel %vm195, %v178, 0
      %v212 = vsel %vm195, %v179, 0
      %v215 = vsel %vm195, %v180, 0
      %v218 = vsel %vm195, %v181, 0
      %v221 = vsel %vm195, %v182, 0
      %v224 = vsel %vm195, %v183, 0
      %v227 = vsel %vm195, %v184, 0
      %v230 = vsel %vm195, %v185, 0
      %v233 = vsel %vm195, %v186, 0
      %v236 = vsel %vm195, %v187, 0
      %v239 = vsel %vm195, %v188, 0
      %v242 = vsel %vm195, %v189, 0
      %244 = vmatpush.msra.mxu0 0.0
      %245 = vmatpush.msra.mxu0 0.0
      %246 = vmatpush.msra.mxu0 0.0
      %247 = vmatpush.msra.mxu0 0.0
      %248 = vmatpush.msra.mxu0 0.0
      %249 = vmatpush.msra.mxu0 0.0
      %250 = vmatpush.msra.mxu0 0.0
      %251 = vmatpush.msra.mxu0 0.0
      %252 = vmatpush.msra.mxu0 0.0
      %253 = vmatpush.msra.mxu0 0.0
      %254 = vmatpush.msra.mxu0 0.0
      %255 = vmatpush.msra.mxu0 0.0
      %256 = vmatpush.msra.mxu0 0.0
      %257 = vmatpush.msra.mxu0 0.0
      %258 = vmatpush.msra.mxu0 0.0
      %259 = vmatpush.msra.mxu0 %v190
      %260 = vmatmul.f32.gmra.mxu0 %v197
      %v261 = vpop.f32.mrf.mxu0
      %v262 = vadd.f32 %v193, %v261
      %263 = vmatmul.f32.gmra.mxu0 %v200
      %v264 = vpop.f32.mrf.mxu0
      %v265 = vadd.f32 %v193, %v264
      %266 = vmatmul.f32.gmra.mxu0 %v203
      %v267 = vpop.f32.mrf.mxu0
      %v268 = vadd.f32 %v193, %v267
      %269 = vmatmul.f32.gmra.mxu0 %v206
      %v270 = vpop.f32.mrf.mxu0
      %v271 = vadd.f32 %v193, %v270
      %272 = vmatmul.f32.gmra.mxu0 %v209
      %v273 = vpop.f32.mrf.mxu0
      %v274 = vadd.f32 %v193, %v273
      %275 = vmatmul.f32.gmra.mxu0 %v212
      %v276 = vpop.f32.mrf.mxu0
      %v277 = vadd.f32 %v193, %v276
      %278 = vmatmul.f32.gmra.mxu0 %v215
      %v279 = vpop.f32.mrf.mxu0
      %v280 = vadd.f32 %v193, %v279
      %281 = vmatmul.f32.gmra.mxu0 %v218
      %v282 = vpop.f32.mrf.mxu0
      %v283 = vadd.f32 %v193, %v282
      %284 = vmatmul.f32.gmra.mxu0 %v221
      %v285 = vpop.f32.mrf.mxu0
      %v286 = vadd.f32 %v193, %v285
      %287 = vmatmul.f32.gmra.mxu0 %v224
      %v288 = vpop.f32.mrf.mxu0
      %v289 = vadd.f32 %v193, %v288
      %290 = vmatmul.f32.gmra.mxu0 %v227
      %v291 = vpop.f32.mrf.mxu0
      %v292 = vadd.f32 %v193, %v291
      %293 = vmatmul.f32.gmra.mxu0 %v230
      %v294 = vpop.f32.mrf.mxu0
      %v295 = vadd.f32 %v193, %v294
      %296 = vmatmul.f32.gmra.mxu0 %v233
      %v297 = vpop.f32.mrf.mxu0
      %v298 = vadd.f32 %v193, %v297
      %299 = vmatmul.f32.gmra.mxu0 %v236
      %v300 = vpop.f32.mrf.mxu0
      %v301 = vadd.f32 %v193, %v300
      %302 = vmatmul.f32.gmra.mxu0 %v239
      %v303 = vpop.f32.mrf.mxu0
      %v304 = vadd.f32 %v193, %v303
      %305 = vmatmul.f32.gmra.mxu0 %v242
      %v306 = vpop.f32.mrf.mxu0
      %v307 = vadd.f32 %v193, %v306
      %308 = vdwg.mxu0
      %v309 = vsub.f32 0.0, %v262
      %v310 = vsub.f32 0.0, %v265
      %v311 = vsub.f32 0.0, %v268
      %v312 = vsub.f32 0.0, %v271
      %v313 = vsub.f32 0.0, %v274
      %v314 = vsub.f32 0.0, %v277
      %v315 = vsub.f32 0.0, %v280
      %v316 = vsub.f32 0.0, %v283
      %v317 = vsub.f32 0.0, %v286
      %v318 = vsub.f32 0.0, %v289
      %v319 = vsub.f32 0.0, %v292
      %v320 = vsub.f32 0.0, %v295
      %v321 = vsub.f32 0.0, %v298
      %v322 = vsub.f32 0.0, %v301
      %v323 = vsub.f32 0.0, %v304
      %v324 = vsub.f32 0.0, %v307
      %v325 = vmul.f32 %v309, 1.442695
      %v326 = vpow.pop %v325
      %v327 = vmul.f32 %v310, 1.442695
      %v328 = vpow.pop %v327
      %v329 = vmul.f32 %v311, 1.442695
      %v330 = vpow.pop %v329
      %v331 = vmul.f32 %v312, 1.442695
      %v332 = vpow.pop %v331
      %v333 = vmul.f32 %v313, 1.442695
      %v334 = vpow.pop %v333
      %v335 = vmul.f32 %v314, 1.442695
      %v336 = vpow.pop %v335
      %v337 = vmul.f32 %v315, 1.442695
      %v338 = vpow.pop %v337
      %v339 = vmul.f32 %v316, 1.442695
      %v340 = vpow.pop %v339
      %v341 = vmul.f32 %v317, 1.442695
      %v342 = vpow.pop %v341
      %v343 = vmul.f32 %v318, 1.442695
      %v344 = vpow.pop %v343
      %v345 = vmul.f32 %v319, 1.442695
      %v346 = vpow.pop %v345
      %v347 = vmul.f32 %v320, 1.442695
      %v348 = vpow.pop %v347
      %v349 = vmul.f32 %v321, 1.442695
      %v350 = vpow.pop %v349
      %v351 = vmul.f32 %v322, 1.442695
      %v352 = vpow.pop %v351
      %v353 = vmul.f32 %v323, 1.442695
      %v354 = vpow.pop %v353
      %v355 = vmul.f32 %v324, 1.442695
      %v356 = vpow.pop %v355
      %v357 = vadd.f32 %v326, 1.0
      %v358 = vadd.f32 %v328, 1.0
      %v359 = vadd.f32 %v330, 1.0
      %v360 = vadd.f32 %v332, 1.0
      %v361 = vadd.f32 %v334, 1.0
      %v362 = vadd.f32 %v336, 1.0
      %v363 = vadd.f32 %v338, 1.0
      %v364 = vadd.f32 %v340, 1.0
      %v365 = vadd.f32 %v342, 1.0
      %v366 = vadd.f32 %v344, 1.0
      %v367 = vadd.f32 %v346, 1.0
      %v368 = vadd.f32 %v348, 1.0
      %v369 = vadd.f32 %v350, 1.0
      %v370 = vadd.f32 %v352, 1.0
      %v371 = vadd.f32 %v354, 1.0
      %v372 = vadd.f32 %v356, 1.0
      %v373 = vrcp.pop %v357
      %v374 = vmul.f32 %v357, %v373
      %v375 = vsub.f32 1.0, %v374
      %v376 = vmul.f32 %v373, %v375
      %v377 = vadd.f32 %v373, %v376
      %vm378 = vweird.f32 %v357
      %vm379 = vweird.f32 %v373
      %vm380 = vmor %vm378, %vm379
      %v381 = vsel %vm380, %v373, %v377
      %v382 = vand.u32 2147483647, %v357
      %vm383 = vcmp.eq.f32.partialorder %v382, 8.507059e+37
      %v384 = vand.u32 %v357, 2147483648
      %v385 = vor.u32 1.1754944e-38, %v384
      %v386 = vsel %vm383, %v385, %v381
      %v387 = vmul.f32 %v262, %v386
      %v388 = vrcp.pop %v358
      %v389 = vmul.f32 %v358, %v388
      %v390 = vsub.f32 1.0, %v389
      %v391 = vmul.f32 %v388, %v390
      %v392 = vadd.f32 %v388, %v391
      %vm393 = vweird.f32 %v358
      %vm394 = vweird.f32 %v388
      %vm395 = vmor %vm393, %vm394
      %v396 = vsel %vm395, %v388, %v392
      %v397 = vand.u32 2147483647, %v358
      %vm398 = vcmp.eq.f32.partialorder %v397, 8.507059e+37
      %v399 = vand.u32 %v358, 2147483648
      %v400 = vor.u32 1.1754944e-38, %v399
      %v401 = vsel %vm398, %v400, %v396
      %v402 = vmul.f32 %v265, %v401
      %v403 = vrcp.pop %v359
      %v404 = vmul.f32 %v359, %v403
      %v405 = vsub.f32 1.0, %v404
      %v406 = vmul.f32 %v403, %v405
      %v407 = vadd.f32 %v403, %v406
      %vm408 = vweird.f32 %v359
      %vm409 = vweird.f32 %v403
      %vm410 = vmor %vm408, %vm409
      %v411 = vsel %vm410, %v403, %v407
      %v412 = vand.u32 2147483647, %v359
      %vm413 = vcmp.eq.f32.partialorder %v412, 8.507059e+37
      %v414 = vand.u32 %v359, 2147483648
      %v415 = vor.u32 1.1754944e-38, %v414
      %v416 = vsel %vm413, %v415, %v411
      %v417 = vmul.f32 %v268, %v416
      %v418 = vrcp.pop %v360
      %v419 = vmul.f32 %v360, %v418
      %v420 = vsub.f32 1.0, %v419
      %v421 = vmul.f32 %v418, %v420
      %v422 = vadd.f32 %v418, %v421
      %vm423 = vweird.f32 %v360
      %vm424 = vweird.f32 %v418
      %vm425 = vmor %vm423, %vm424
      %v426 = vsel %vm425, %v418, %v422
      %v427 = vand.u32 2147483647, %v360
      %vm428 = vcmp.eq.f32.partialorder %v427, 8.507059e+37
      %v429 = vand.u32 %v360, 2147483648
      %v430 = vor.u32 1.1754944e-38, %v429
      %v431 = vsel %vm428, %v430, %v426
      %v432 = vmul.f32 %v271, %v431
      %v433 = vrcp.pop %v361
      %v434 = vmul.f32 %v361, %v433
      %v435 = vsub.f32 1.0, %v434
      %v436 = vmul.f32 %v433, %v435
      %v437 = vadd.f32 %v433, %v436
      %vm438 = vweird.f32 %v361
      %vm439 = vweird.f32 %v433
      %vm440 = vmor %vm438, %vm439
      %v441 = vsel %vm440, %v433, %v437
      %v442 = vand.u32 2147483647, %v361
      %vm443 = vcmp.eq.f32.partialorder %v442, 8.507059e+37
      %v444 = vand.u32 %v361, 2147483648
      %v445 = vor.u32 1.1754944e-38, %v444
      %v446 = vsel %vm443, %v445, %v441
      %v447 = vmul.f32 %v274, %v446
      %v448 = vrcp.pop %v362
      %v449 = vmul.f32 %v362, %v448
      %v450 = vsub.f32 1.0, %v449
      %v451 = vmul.f32 %v448, %v450
      %v452 = vadd.f32 %v448, %v451
      %vm453 = vweird.f32 %v362
      %vm454 = vweird.f32 %v448
      %vm455 = vmor %vm453, %vm454
      %v456 = vsel %vm455, %v448, %v452
      %v457 = vand.u32 2147483647, %v362
      %vm458 = vcmp.eq.f32.partialorder %v457, 8.507059e+37
      %v459 = vand.u32 %v362, 2147483648
      %v460 = vor.u32 1.1754944e-38, %v459
      %v461 = vsel %vm458, %v460, %v456
      %v462 = vmul.f32 %v277, %v461
      %v463 = vrcp.pop %v363
      %v464 = vmul.f32 %v363, %v463
      %v465 = vsub.f32 1.0, %v464
      %v466 = vmul.f32 %v463, %v465
      %v467 = vadd.f32 %v463, %v466
      %vm468 = vweird.f32 %v363
      %vm469 = vweird.f32 %v463
      %vm470 = vmor %vm468, %vm469
      %v471 = vsel %vm470, %v463, %v467
      %v472 = vand.u32 2147483647, %v363
      %vm473 = vcmp.eq.f32.partialorder %v472, 8.507059e+37
      %v474 = vand.u32 %v363, 2147483648
      %v475 = vor.u32 1.1754944e-38, %v474
      %v476 = vsel %vm473, %v475, %v471
      %v477 = vmul.f32 %v280, %v476
      %v478 = vrcp.pop %v364
      %v479 = vmul.f32 %v364, %v478
      %v480 = vsub.f32 1.0, %v479
      %v481 = vmul.f32 %v478, %v480
      %v482 = vadd.f32 %v478, %v481
      %vm483 = vweird.f32 %v364
      %vm484 = vweird.f32 %v478
      %vm485 = vmor %vm483, %vm484
      %v486 = vsel %vm485, %v478, %v482
      %v487 = vand.u32 2147483647, %v364
      %vm488 = vcmp.eq.f32.partialorder %v487, 8.507059e+37
      %v489 = vand.u32 %v364, 2147483648
      %v490 = vor.u32 1.1754944e-38, %v489
      %v491 = vsel %vm488, %v490, %v486
      %v492 = vmul.f32 %v283, %v491
      %v493 = vrcp.pop %v365
      %v494 = vmul.f32 %v365, %v493
      %v495 = vsub.f32 1.0, %v494
      %v496 = vmul.f32 %v493, %v495
      %v497 = vadd.f32 %v493, %v496
      %vm498 = vweird.f32 %v365
      %vm499 = vweird.f32 %v493
      %vm500 = vmor %vm498, %vm499
      %v501 = vsel %vm500, %v493, %v497
      %v502 = vand.u32 2147483647, %v365
      %vm503 = vcmp.eq.f32.partialorder %v502, 8.507059e+37
      %v504 = vand.u32 %v365, 2147483648
      %v505 = vor.u32 1.1754944e-38, %v504
      %v506 = vsel %vm503, %v505, %v501
      %v507 = vmul.f32 %v286, %v506
      %v508 = vrcp.pop %v366
      %v509 = vmul.f32 %v366, %v508
      %v510 = vsub.f32 1.0, %v509
      %v511 = vmul.f32 %v508, %v510
      %v512 = vadd.f32 %v508, %v511
      %vm513 = vweird.f32 %v366
      %vm514 = vweird.f32 %v508
      %vm515 = vmor %vm513, %vm514
      %v516 = vsel %vm515, %v508, %v512
      %v517 = vand.u32 2147483647, %v366
      %vm518 = vcmp.eq.f32.partialorder %v517, 8.507059e+37
      %v519 = vand.u32 %v366, 2147483648
      %v520 = vor.u32 1.1754944e-38, %v519
      %v521 = vsel %vm518, %v520, %v516
      %v522 = vmul.f32 %v289, %v521
      %v523 = vrcp.pop %v367
      %v524 = vmul.f32 %v367, %v523
      %v525 = vsub.f32 1.0, %v524
      %v526 = vmul.f32 %v523, %v525
      %v527 = vadd.f32 %v523, %v526
      %vm528 = vweird.f32 %v367
      %vm529 = vweird.f32 %v523
      %vm530 = vmor %vm528, %vm529
      %v531 = vsel %vm530, %v523, %v527
      %v532 = vand.u32 2147483647, %v367
      %vm533 = vcmp.eq.f32.partialorder %v532, 8.507059e+37
      %v534 = vand.u32 %v367, 2147483648
      %v535 = vor.u32 1.1754944e-38, %v534
      %v536 = vsel %vm533, %v535, %v531
      %v537 = vmul.f32 %v292, %v536
      %v538 = vrcp.pop %v368
      %v539 = vmul.f32 %v368, %v538
      %v540 = vsub.f32 1.0, %v539
      %v541 = vmul.f32 %v538, %v540
      %v542 = vadd.f32 %v538, %v541
      %vm543 = vweird.f32 %v368
      %vm544 = vweird.f32 %v538
      %vm545 = vmor %vm543, %vm544
      %v546 = vsel %vm545, %v538, %v542
      %v547 = vand.u32 2147483647, %v368
      %vm548 = vcmp.eq.f32.partialorder %v547, 8.507059e+37
      %v549 = vand.u32 %v368, 2147483648
      %v550 = vor.u32 1.1754944e-38, %v549
      %v551 = vsel %vm548, %v550, %v546
      %v552 = vmul.f32 %v295, %v551
      %v553 = vrcp.pop %v369
      %v554 = vmul.f32 %v369, %v553
      %v555 = vsub.f32 1.0, %v554
      %v556 = vmul.f32 %v553, %v555
      %v557 = vadd.f32 %v553, %v556
      %vm558 = vweird.f32 %v369
      %vm559 = vweird.f32 %v553
      %vm560 = vmor %vm558, %vm559
      %v561 = vsel %vm560, %v553, %v557
      %v562 = vand.u32 2147483647, %v369
      %vm563 = vcmp.eq.f32.partialorder %v562, 8.507059e+37
      %v564 = vand.u32 %v369, 2147483648
      %v565 = vor.u32 1.1754944e-38, %v564
      %v566 = vsel %vm563, %v565, %v561
      %v567 = vmul.f32 %v298, %v566
      %v568 = vrcp.pop %v370
      %v569 = vmul.f32 %v370, %v568
      %v570 = vsub.f32 1.0, %v569
      %v571 = vmul.f32 %v568, %v570
      %v572 = vadd.f32 %v568, %v571
      %vm573 = vweird.f32 %v370
      %vm574 = vweird.f32 %v568
      %vm575 = vmor %vm573, %vm574
      %v576 = vsel %vm575, %v568, %v572
      %v577 = vand.u32 2147483647, %v370
      %vm578 = vcmp.eq.f32.partialorder %v577, 8.507059e+37
      %v579 = vand.u32 %v370, 2147483648
      %v580 = vor.u32 1.1754944e-38, %v579
      %v581 = vsel %vm578, %v580, %v576
      %v582 = vmul.f32 %v301, %v581
      %v583 = vrcp.pop %v371
      %v584 = vmul.f32 %v371, %v583
      %v585 = vsub.f32 1.0, %v584
      %v586 = vmul.f32 %v583, %v585
      %v587 = vadd.f32 %v583, %v586
      %vm588 = vweird.f32 %v371
      %vm589 = vweird.f32 %v583
      %vm590 = vmor %vm588, %vm589
      %v591 = vsel %vm590, %v583, %v587
      %v592 = vand.u32 2147483647, %v371
      %vm593 = vcmp.eq.f32.partialorder %v592, 8.507059e+37
      %v594 = vand.u32 %v371, 2147483648
      %v595 = vor.u32 1.1754944e-38, %v594
      %v596 = vsel %vm593, %v595, %v591
      %v597 = vmul.f32 %v304, %v596
      %v598 = vrcp.pop %v372
      %v599 = vmul.f32 %v372, %v598
      %v600 = vsub.f32 1.0, %v599
      %v601 = vmul.f32 %v598, %v600
      %v602 = vadd.f32 %v598, %v601
      %vm603 = vweird.f32 %v372
      %vm604 = vweird.f32 %v598
      %vm605 = vmor %vm603, %vm604
      %v606 = vsel %vm605, %v598, %v602
      %v607 = vand.u32 2147483647, %v372
      %vm608 = vcmp.eq.f32.partialorder %v607, 8.507059e+37
      %v609 = vand.u32 %v372, 2147483648
      %v610 = vor.u32 1.1754944e-38, %v609
      %v611 = vsel %vm608, %v610, %v606
      %v612 = vmul.f32 %v307, %v611
      %613 = vst.msk [vmem:[%s172] sm:$0xff] %vm195, %v387
      %614 = vst.msk [vmem:[%s172 + $0x8] sm:$0xff] %vm195, %v402
      %615 = vst.msk [vmem:[%s172 + $0x10] sm:$0xff] %vm195, %v417
      %616 = vst.msk [vmem:[%s172 + $0x18] sm:$0xff] %vm195, %v432
      %617 = vst.msk [vmem:[%s172 + $0x20] sm:$0xff] %vm195, %v447
      %618 = vst.msk [vmem:[%s172 + $0x28] sm:$0xff] %vm195, %v462
      %619 = vst.msk [vmem:[%s172 + $0x30] sm:$0xff] %vm195, %v477
      %620 = vst.msk [vmem:[%s172 + $0x38] sm:$0xff] %vm195, %v492
      %621 = vst.msk [vmem:[%s172 + $0x40] sm:$0xff] %vm195, %v507
      %622 = vst.msk [vmem:[%s172 + $0x48] sm:$0xff] %vm195, %v522
      %623 = vst.msk [vmem:[%s172 + $0x50] sm:$0xff] %vm195, %v537
      %624 = vst.msk [vmem:[%s172 + $0x58] sm:$0xff] %vm195, %v552
      %625 = vst.msk [vmem:[%s172 + $0x60] sm:$0xff] %vm195, %v567
      %626 = vst.msk [vmem:[%s172 + $0x68] sm:$0xff] %vm195, %v582
      %627 = vst.msk [vmem:[%s172 + $0x70] sm:$0xff] %vm195, %v597
      %628 = vst.msk [vmem:[%s172 + $0x78] sm:$0xff] %vm195, %v612
      %s629 = smul.u32 16, %s14
      %p630 = scmp.lt.s32.totalorder %s629, 63
      %s631 = scalar_select %p630, %s629, 63
      %s632 = smul.addr %s631, 8
      %s633 = scalar_lea.vmem %s3, %s632
      // Predicated region
      $region33: #{tpu_custom_call.1} parent=31 // pred_check
        %p634 = pneg %p100
      $region34: #{tpu_custom_call.1} parent=31 // pred_check_branch
        %636 = sbr.rel (%p634) target = $region36
      $region35: #{tpu_custom_call.1} parent=31 // pred_region
        %s637 = smul.u32 16, %s14
      $region36: #{tpu_custom_call.1} parent=31 // pred_fallthru
        _
    $region32: #{tpu_custom_call.1} parent=5 // pred_fallthru
      _
    %p638 = scmp.le.s32.totalorder 2, %s9
    // Predicated region
    $region37: #{tpu_custom_call.1} parent=5 // pred_check
      %p639 = pneg %p638
    $region38: #{tpu_custom_call.1} parent=5 // pred_check_branch
      %641 = sbr.rel (%p639) target = $region40
    $region39: #{tpu_custom_call.1} parent=5 // pred_region
      %s642 = ssub.s32 %s9, 2
      // Predicated region
      $region41: #{tpu_custom_call.1} parent=39 // pred_check
        %p643 = pneg %p106
      $region42: #{tpu_custom_call.1} parent=39 // pred_check_branch
        %645 = sbr.rel (%p643) target = $region44
      $region43: #{tpu_custom_call.1} parent=39 // pred_region
        %s646 = smul.u32 16, %s15
        %p647 = scmp.lt.s32.totalorder %s646, 63
        %s648 = scalar_select %p647, %s646, 63
        %s649 = smul.addr %s648, 8
        %s650 = scalar_lea.vmem %s3, %s649
      $region44: #{tpu_custom_call.1} parent=39 // pred_fallthru
        _
    $region40: #{tpu_custom_call.1} parent=5 // pred_fallthru
      _
  $region6: #{tpu_custom_call.1} parent=0 // loop_footer
    %s13 = sadd.s32 1, %s9
  $region7: #{tpu_custom_call.1} parent=0 // loop_footer_branch
    %8 = sbr.rel target = $region3
  $region8: #{tpu_custom_call.1} parent=0 // loop_exit
    _

</llo_original>
